<compile_context>
chip_gen: v7x
topology: tpu7x:2x2x1
jax: 0.10.0
libtpu: 0.0.40
codegen_flags: <defaults>
</compile_context>

<pallas_src>
import jax
import jax.numpy as jnp
from jax import lax
from jax.experimental import pallas as pl
from jax.experimental.pallas import tpu as pltpu


def _round_up(a, m):
    return ((a + m - 1) // m) * m


def weighted_aggregate_kernel(x_ref, w_ref, mask_ref, out_ref, attn_ref):
    # x_ref:    (BB, V, D) f32 batch block
    # w_ref:    (D, D)     bf16 shared attention weights (pre-cast in wrapper)
    # mask_ref: (N, N)     f32 block-diagonal mask, N = BB*V (precomputed)
    bb, v, d = x_ref.shape
    n = bb * v

    # (1) aux = x @ W — fold the whole batch block into one MXU pass of N rows.
    x = x_ref[...].reshape(n, d)
    a = jnp.dot(x.astype(jnp.bfloat16), w_ref[...],
                preferred_element_type=jnp.float32)            # (N, D) f32

    # (2) Gram matrix as ONE flattened matmul, contracting the minor (lane)
    #     dim of both operands (no transpose/relayout). Cross-batch products
    #     are killed by the block-diagonal mask after the relu.
    a_bf = a.astype(jnp.bfloat16)
    p_full = lax.dot_general(
        a_bf, a_bf,
        dimension_numbers=(((1,), (1,)), ((), ())),
        preferred_element_type=jnp.float32)                    # (N, N) f32
    p = jnp.maximum(p_full, 0.0) * mask_ref[...]               # (N, N) f32

    # (3) One reduction path reused everywhere:
    #     rs[b,v]  = sum_j p[b,v,j]   (lane reduce; broadcast-ready shape)
    #     total[b] = sum_v rs[b,v]
    #     attn     = rs / total       (exact divide -> weights sum to 1)
    rs = jnp.sum(p, axis=1, keepdims=True).reshape(bb, v, 1)   # (BB, V, 1)
    total = jnp.sum(rs, axis=1, keepdims=True)                 # (BB, 1, 1)
    attn = rs / total                                          # (BB, V, 1)

    # output[b] = sum_v attn[b, v] * aux[b, v, :]
    a3 = a.reshape(bb, v, d)
    out_ref[...] = jnp.sum(a3 * attn, axis=1).astype(out_ref.dtype)   # (BB, D)

    # final_attention_weights[b] = attn[b, :], stored lane-dense (padded to the
    # attn block's lane width; the wrapper slices [:, :V]).
    attn_lane = attn.reshape(bb, v)
    pad = attn_ref.shape[1] - v
    if pad:
        attn_lane = jnp.concatenate(
            [attn_lane, jnp.zeros((bb, pad), attn_lane.dtype)], axis=1)
    attn_ref[...] = attn_lane.astype(attn_ref.dtype)


def _pick_block_b(B, V, D):
    """Largest 8-aligned batch block under a conservative VMEM budget.

    One grid step is preferred (the grid is a serial loop on single-TC chips);
    the block only shrinks when per-step VMEM would exceed a budget that is
    safe under every generation's default scoped-VMEM limit (16 MiB on v5e;
    v7x also has the smallest physical VMEM).
    """
    budget = 12 * 1024 * 1024  # bytes

    def vmem_bytes(bb):
        n = bb * V
        return (2 * bb * V * D * 4          # x block (f32, double-buffered)
                + 2 * D * D * 2             # W (bf16, double-buffered)
                + 2 * n * n * 4             # block-diag mask (f32)
                + bb * V * D * (4 + 2)      # a in f32 + bf16 copy
                + 2 * n * n * 4             # Gram matrix + masked copy (f32)
                + 2 * (bb * D + bb * 128) * 4)  # out + attn blocks

    bb = _round_up(B, 8)
    while bb > 8 and vmem_bytes(bb) > budget:
        bb = _round_up((bb + 1) // 2, 8)
    return bb


def weighted_aggregate(x, attention_weights, *, block_b=None):
    """x: (B, V, D) float32; attention_weights: (D, D) float32.

    Returns (output (B, D), final_attention_weights (B, V)) — same semantics
    as the PyTorch module's aux branch with B > 1 (the .squeeze() is a no-op).
    """
    B, V, D = x.shape
    if block_b is None:
        block_b = _pick_block_b(B, V, D)
    block_b = max(8, _round_up(block_b, 8))
    Bp = _round_up(B, block_b)
    nb = Bp // block_b
    if Bp != B:
        # Zero-pad the batch dim; padded rows give total==0 -> NaN attn/out,
        # which is sliced off below (matches PyTorch's own 0/0 behavior for
        # all-zero batches). The block-diagonal mask keeps padded rows from
        # polluting real batches.
        x = jnp.pad(x, ((0, Bp - B), (0, 0), (0, 0)))

    # Hoisted cast: bf16 W halves its HBM->VMEM DMA; f32 accumulation is kept
    # inside the kernel via preferred_element_type.
    w_bf16 = attention_weights.astype(jnp.bfloat16)

    # Precomputed block-diagonal mask over the flattened (block_b*V) rows.
    n = block_b * V
    bid = jnp.arange(n, dtype=jnp.int32) // V
    mask = (bid[:, None] == bid[None, :]).astype(jnp.float32)   # (N, N)

    attn_lanes = _round_up(V, 128)   # lane-dense attn slab; sliced to V below

    out, attn = pl.pallas_call(
        weighted_aggregate_kernel,
        out_shape=(
            jax.ShapeDtypeStruct((Bp, D), x.dtype),
            jax.ShapeDtypeStruct((Bp, attn_lanes), x.dtype),
        ),
        grid_spec=pltpu.PrefetchScalarGridSpec(
            num_scalar_prefetch=0,
            grid=(nb,),
            in_specs=[
                pl.BlockSpec((block_b, V, D), lambda i: (i, 0, 0)),  # batch block
                pl.BlockSpec((D, D), lambda i: (0, 0)),              # shared W
                pl.BlockSpec((n, n), lambda i: (0, 0)),              # shared mask
            ],
            out_specs=(
                pl.BlockSpec((block_b, D), lambda i: (i, 0)),
                pl.BlockSpec((block_b, attn_lanes), lambda i: (i, 0)),
            ),
        ),
        compiler_params=pltpu.CompilerParams(
            dimension_semantics=("parallel",)),
    )(x, w_bf16, mask)

    return out[:B], attn[:B, :V]


if __name__ == "__main__":
    key = jax.random.PRNGKey(0)
    kx, kw = jax.random.split(key)

    # Small shapes consistent with the aux branch: batch=8, views=8, feat_dim=128.
    B, V, D = 8, 8, 128
    x = jax.random.normal(kx, (B, V, D), dtype=jnp.float32)

    # nn.Parameter((r1 - r2) * rand(D, D) + r2) with r1=-1, r2=1 -> uniform(-1, 1]
    W = jax.random.uniform(kw, (D, D), minval=-1.0, maxval=1.0, dtype=jnp.float32)

    out, attn = weighted_aggregate(x, W)
    out, attn = jax.block_until_ready((out, attn))

    # Pure-JAX f32 reference of the exact PyTorch forward (aux branch).
    a_ref = jnp.einsum("bvd,de->bve", x, W)
    p_ref = jnp.maximum(jnp.einsum("bvd,bwd->bvw", a_ref, a_ref), 0.0)
    s_ref = jnp.sum(p_ref, axis=(1, 2), keepdims=True)
    attn_ref = jnp.sum(p_ref / s_ref, axis=1)                    # (B, V)
    out_ref = jnp.sum(a_ref * attn_ref[..., None], axis=1)       # (B, D)

    assert out.shape == (B, D) and attn.shape == (B, V)
    # Tolerances account for bf16 MXU operands (f32 accumulation, exact
    # normalization; all elementwise math in f32).
    assert jnp.allclose(attn, attn_ref, atol=5e-3, rtol=5e-2), "attn mismatch"
    assert jnp.allclose(out, out_ref, atol=5e-2, rtol=5e-2), "output mismatch"
    print("KERNEL_OK")
</pallas_src>

<mosaic_0001>
module attributes {stable_mosaic.version = 11 : i64} {
  func.func @weighted_aggregate_kernel(%arg0: i32, %arg1: memref<8x8x128xf32, #tpu.memory_space<vmem>>, %arg2: memref<128x128xbf16, #tpu.memory_space<vmem>>, %arg3: memref<64x64xf32, #tpu.memory_space<vmem>>, %arg4: memref<8x128xf32, #tpu.memory_space<vmem>>, %arg5: memref<8x128xf32, #tpu.memory_space<vmem>>) attributes {dimension_semantics = [#tpu.dimension_semantics<parallel>], iteration_bounds = array<i64: 1>, scalar_prefetch = 0 : i64, scratch_operands = 0 : i64, tpu.core_type = #tpu.core_type<tc>, window_params = [{transform_indices = @transform_0, window_bounds = array<i64: 8, 8, 128>}, {pipeline_mode = #tpu.pipeline_mode<synchronous>, transform_indices = @transform_1, window_bounds = array<i64: 128, 128>}, {pipeline_mode = #tpu.pipeline_mode<synchronous>, transform_indices = @transform_2, window_bounds = array<i64: 64, 64>}, {transform_indices = @transform_3, window_bounds = array<i64: 8, 128>}, {transform_indices = @transform_4, window_bounds = array<i64: 8, 128>}]} {
    %c0 = arith.constant 0 : index
    %c0_0 = arith.constant 0 : index
    %c0_1 = arith.constant 0 : index
    %0 = vector.load %arg1[%c0, %c0_0, %c0_1] : memref<8x8x128xf32, #tpu.memory_space<vmem>>, vector<8x8x128xf32>
    %1 = vector.shape_cast %0 : vector<8x8x128xf32> to vector<64x128xf32>
    %2 = arith.truncf %1 : vector<64x128xf32> to vector<64x128xbf16>
    %c0_2 = arith.constant 0 : index
    %c0_3 = arith.constant 0 : index
    %3 = vector.load %arg2[%c0_2, %c0_3] : memref<128x128xbf16, #tpu.memory_space<vmem>>, vector<128x128xbf16>
    %cst = arith.constant dense<0.000000e+00> : vector<64x128xf32>
    %4 = tpu.matmul %2, %3, %cst {dimension_numbers = #tpu.dot_dimension_numbers<[1], [0], [0], [1], [0, 0, 1, 1], [], []>} : vector<64x128xbf16>, vector<128x128xbf16>, vector<64x128xf32> -> vector<64x128xf32>
    %5 = arith.truncf %4 : vector<64x128xf32> to vector<64x128xbf16>
    %cst_4 = arith.constant dense<0.000000e+00> : vector<64x64xf32>
    %6 = tpu.matmul %5, %5, %cst_4 {dimension_numbers = #tpu.dot_dimension_numbers<[1], [1], [0], [0], [0, 0, 1, 0], [], []>} : vector<64x128xbf16>, vector<64x128xbf16>, vector<64x64xf32> -> vector<64x64xf32>
    %cst_5 = arith.constant 0.000000e+00 : f32
    %7 = vector.broadcast %cst_5 : f32 to vector<64x64xf32>
    %8 = arith.maximumf %6, %7 : vector<64x64xf32>
    %c0_6 = arith.constant 0 : index
    %c0_7 = arith.constant 0 : index
    %9 = vector.load %arg3[%c0_6, %c0_7] : memref<64x64xf32, #tpu.memory_space<vmem>>, vector<64x64xf32>
    %10 = arith.mulf %8, %9 : vector<64x64xf32>
    %cst_8 = arith.constant dense<0.000000e+00> : vector<64xf32>
    %11 = vector.multi_reduction <add>, %10, %cst_8 [1] : vector<64x64xf32> to vector<64xf32>
    %12 = vector.shape_cast %11 : vector<64xf32> to vector<64x1xf32>
    %13 = vector.shape_cast %12 : vector<64x1xf32> to vector<8x8x1xf32>
    %cst_9 = arith.constant dense<0.000000e+00> : vector<8x1xf32>
    %14 = vector.multi_reduction <add>, %13, %cst_9 [1] : vector<8x8x1xf32> to vector<8x1xf32>
    %15 = vector.shape_cast %14 : vector<8x1xf32> to vector<8x1x1xf32>
    %16 = vector.broadcast %15 : vector<8x1x1xf32> to vector<8x8x1xf32>
    %17 = arith.divf %13, %16 : vector<8x8x1xf32>
    %18 = vector.shape_cast %4 : vector<64x128xf32> to vector<8x8x128xf32>
    %19 = vector.broadcast %17 : vector<8x8x1xf32> to vector<8x8x128xf32>
    %20 = arith.mulf %18, %19 : vector<8x8x128xf32>
    %cst_10 = arith.constant dense<0.000000e+00> : vector<8x128xf32>
    %21 = vector.multi_reduction <add>, %20, %cst_10 [1] : vector<8x8x128xf32> to vector<8x128xf32>
    %c0_11 = arith.constant 0 : index
    %c0_12 = arith.constant 0 : index
    %22 = vector.load %arg4[%c0_11, %c0_12] : memref<8x128xf32, #tpu.memory_space<vmem>>, vector<8x128xf32>
    tpu.vector_store %arg4[%c0_11, %c0_12], %21 {strides = array<i32>} : memref<8x128xf32, #tpu.memory_space<vmem>>, vector<8x128xf32>,
    %23 = vector.shape_cast %17 : vector<8x8x1xf32> to vector<8x8xf32>
    %cst_13 = arith.constant 0.000000e+00 : f32
    %24 = vector.broadcast %cst_13 : f32 to vector<8x120xf32>
    %25 = tpu.concatenate %23, %24 in 1 : vector<8x8xf32>, vector<8x120xf32> -> vector<8x128xf32>
    %c0_14 = arith.constant 0 : index
    %c0_15 = arith.constant 0 : index
    %26 = vector.load %arg5[%c0_14, %c0_15] : memref<8x128xf32, #tpu.memory_space<vmem>>, vector<8x128xf32>
    tpu.vector_store %arg5[%c0_14, %c0_15], %25 {strides = array<i32>} : memref<8x128xf32, #tpu.memory_space<vmem>>, vector<8x128xf32>,
    return
  }
  func.func @transform_0(%arg0: i32) -> (i32, i32, i32) {
    %c0_i32 = arith.constant 0 : i32
    %c0_i32_0 = arith.constant 0 : i32
    %c0_i32_1 = arith.constant 0 : i32
    return %arg0, %c0_i32, %c0_i32_0 : i32, i32, i32
  }
  func.func @transform_1(%arg0: i32) -> (i32, i32) {
    %c0_i32 = arith.constant 0 : i32
    %c0_i32_0 = arith.constant 0 : i32
    %c0_i32_1 = arith.constant 0 : i32
    return %c0_i32, %c0_i32_0 : i32, i32
  }
  func.func @transform_2(%arg0: i32) -> (i32, i32) {
    %c0_i32 = arith.constant 0 : i32
    %c0_i32_0 = arith.constant 0 : i32
    %c0_i32_1 = arith.constant 0 : i32
    return %c0_i32, %c0_i32_0 : i32, i32
  }
  func.func @transform_3(%arg0: i32) -> (i32, i32) {
    %c0_i32 = arith.constant 0 : i32
    %c0_i32_0 = arith.constant 0 : i32
    return %arg0, %c0_i32 : i32, i32
  }
  func.func @transform_4(%arg0: i32) -> (i32, i32) {
    %c0_i32 = arith.constant 0 : i32
    %c0_i32_0 = arith.constant 0 : i32
    return %arg0, %c0_i32 : i32, i32
  }
}

</mosaic_0001>

<llo_original>
// kernel: tpu_custom_call.1
$region0: #{tpu_custom_call.1}
  #allocation0 [shape = 'u32[]', space=smem, size = 0x4, offset = 0x4, fixed_abs, tag = 'smem constant byte address 0x4 - core index']
  #allocation1 [shape = 'u32[144,128]{1,0:T(1,128)}', space=vmem, size = 0x12000, scoped, tag = 'internal scratch']
  %s0 = inlined_call_operand.hbm [shape: f32[8,8,128], index: 0, kind: input, shape index: {}]
  %s1 = inlined_call_operand.hbm [shape: bf16[128,128], index: 1, kind: input, shape index: {}]
  %s2 = inlined_call_operand.hbm [shape: f32[64,64], index: 2, kind: input, shape index: {}]
  %s3 = inlined_call_operand.hbm [shape: f32[8,128], index: 3, kind: output, shape index: {0}]
  %s4 = inlined_call_operand.hbm [shape: f32[8,128], index: 4, kind: output, shape index: {1}]
  %5 = xla_tuple %s3, %s4
  %s6 = sld [smem:[#allocation0]]
  $region42: #{tpu_custom_call.1} parent=0
    _
  %s8 = ssub.s32 1, %s6
  %s9 = scalar_select 0, %s8, %s6
  $region1: #{tpu_custom_call.1} parent=0
    #allocation2 [shape = 'u8[32768]{0}', space=vmem, size = 0x8000, scoped, tag = 'input window, operand 0, single buffered']
    #allocation3 [shape = 's32[1]{0}', space=sflag, size = 0x4, scoped, tag = 'scoped memory for tpu_custom_call.1']
    #allocation4 [shape = 's32[1]{0}', space=sflag, size = 0x4, scoped, tag = 'scoped memory for tpu_custom_call.1']
    #allocation5 [shape = 'u8[32768]{0}', space=vmem, size = 0x8000, scoped, tag = 'input window, operand 1, single buffered']
    #allocation6 [shape = 's32[1]{0}', space=sflag, size = 0x4, scoped, tag = 'scoped memory for tpu_custom_call.1']
    #allocation7 [shape = 'u8[32768]{0}', space=vmem, size = 0x8000, scoped, tag = 'input window, operand 2, single buffered']
    #allocation8 [shape = 'u8[4096]{0}', space=vmem, size = 0x1000, scoped, tag = 'output window, operand 0, single buffered']
    #allocation9 [shape = 'u8[4096]{0}', space=vmem, size = 0x1000, scoped, tag = 'output window, operand 1, single buffered']
    #allocation10 [shape = 's32[1]{0}', space=sflag, size = 0x4, scoped, tag = 'scoped memory for tpu_custom_call.1']
    %10 = vsyncpa [#allocation3], 0
    %11 = vsyncpa [#allocation6], 0
    %12 = vsyncpa [#allocation4], 0
    %13 = vsyncpa [#allocation10], 0
    // Predicated region
    $region2: #{tpu_custom_call.1} parent=1 // pred_check
      _
    $region3: #{tpu_custom_call.1} parent=1 // pred_check_branch
      %15 = sbr.rel (0) target = $region5
    $region4: #{tpu_custom_call.1} parent=1 // pred_region
      %s17 = ssub.s32 1024, 1024
      %18 = vsyncadd [#allocation3], %s17
      %s19 = sshll.u32 [#allocation2], 4
      %s20 = int_to_ptr.vmem [resolvable:$true] %s19
      %25 = dma.hbm_to_vmem [thread:$0]  %s0, 1024, %s20, [#allocation3], 128, 128, 8
    $region5: #{tpu_custom_call.1} parent=1 // pred_fallthru
      _
    // Predicated region
    $region6: #{tpu_custom_call.1} parent=1 // pred_check
      _
    $region7: #{tpu_custom_call.1} parent=1 // pred_check_branch
      %27 = sbr.rel (0) target = $region9
    $region8: #{tpu_custom_call.1} parent=1 // pred_region
      %s29 = ssub.s32 1024, 1024
      %30 = vsyncadd [#allocation6], %s29
      %s31 = sshll.u32 [#allocation5], 4
      %s32 = int_to_ptr.vmem [resolvable:$true] %s31
      %37 = dma.hbm_to_vmem [thread:$0]  %s1, 1024, %s32, [#allocation6], 64, 64, 4
    $region9: #{tpu_custom_call.1} parent=1 // pred_fallthru
      _
    // Predicated region
    $region10: #{tpu_custom_call.1} parent=1 // pred_check
      _
    $region11: #{tpu_custom_call.1} parent=1 // pred_check_branch
      %39 = sbr.rel (0) target = $region13
    $region12: #{tpu_custom_call.1} parent=1 // pred_region
      %s41 = ssub.s32 1024, 1024
      %42 = vsyncadd [#allocation6], %s41
      %s43 = sshll.u32 [#allocation7], 4
      %s44 = int_to_ptr.vmem [resolvable:$true] %s43
      %49 = dma.hbm_to_vmem [thread:$0]  %s2, 1024, %s44, [#allocation6], 128, 128, 8
    $region13: #{tpu_custom_call.1} parent=1 // pred_fallthru
      _
    // Predicated region
    $region14: #{tpu_custom_call.1} parent=1 // pred_check
      _
    $region15: #{tpu_custom_call.1} parent=1 // pred_check_branch
      %51 = sbr.rel (0) target = $region17
    $region16: #{tpu_custom_call.1} parent=1 // pred_region
      %52 = dma.done [#allocation3], 1024
    $region17: #{tpu_custom_call.1} parent=1 // pred_fallthru
      _
    // Predicated region
    $region18: #{tpu_custom_call.1} parent=1 // pred_check
      _
    $region19: #{tpu_custom_call.1} parent=1 // pred_check_branch
      %54 = sbr.rel (0) target = $region21
    $region20: #{tpu_custom_call.1} parent=1 // pred_region
      %55 = dma.done [#allocation6], 1024
    $region21: #{tpu_custom_call.1} parent=1 // pred_fallthru
      _
    // Predicated region
    $region22: #{tpu_custom_call.1} parent=1 // pred_check
      _
    $region23: #{tpu_custom_call.1} parent=1 // pred_check_branch
      %57 = sbr.rel (0) target = $region25
    $region24: #{tpu_custom_call.1} parent=1 // pred_region
      %58 = dma.done [#allocation6], 1024
    $region25: #{tpu_custom_call.1} parent=1 // pred_fallthru
      _
    %v60 = vld [vmem:[#allocation2] sm:$0xff]
    %v61 = vld [vmem:[#allocation2 + $0x8] sm:$0xff]
    %v62 = vld [vmem:[#allocation2 + $0x10] sm:$0xff]
    %v63 = vld [vmem:[#allocation2 + $0x18] sm:$0xff]
    %v64 = vld [vmem:[#allocation2 + $0x20] sm:$0xff]
    %v65 = vld [vmem:[#allocation2 + $0x28] sm:$0xff]
    %v66 = vld [vmem:[#allocation2 + $0x30] sm:$0xff]
    %v67 = vld [vmem:[#allocation2 + $0x38] sm:$0xff]
    %v68 = vpack.c.bf16 %v61, %v60
    %v69 = vpack.c.bf16 %v63, %v62
    %v70 = vpack.c.bf16 %v65, %v64
    %v71 = vpack.c.bf16 %v67, %v66
    %v72 = vld [vmem:[#allocation5] sm:$0xf]
    %v73 = vld [vmem:[#allocation5 + $0x4] sm:$0xf]
    %v74 = vld [vmem:[#allocation5 + $0x8] sm:$0xf]
    %v75 = vld [vmem:[#allocation5 + $0xc] sm:$0xf]
    %v76 = vld [vmem:[#allocation5 + $0x10] sm:$0xf]
    %v77 = vld [vmem:[#allocation5 + $0x14] sm:$0xf]
    %v78 = vld [vmem:[#allocation5 + $0x18] sm:$0xf]
    %v79 = vld [vmem:[#allocation5 + $0x1c] sm:$0xf]
    %v80 = vld [vmem:[#allocation5 + $0x20] sm:$0xf]
    %v81 = vld [vmem:[#allocation5 + $0x24] sm:$0xf]
    %v82 = vld [vmem:[#allocation5 + $0x28] sm:$0xf]
    %v83 = vld [vmem:[#allocation5 + $0x2c] sm:$0xf]
    %v84 = vld [vmem:[#allocation5 + $0x30] sm:$0xf]
    %v85 = vld [vmem:[#allocation5 + $0x34] sm:$0xf]
    %v86 = vld [vmem:[#allocation5 + $0x38] sm:$0xf]
    %v87 = vld [vmem:[#allocation5 + $0x3c] sm:$0xf]
    %v104 = vunpack.c.l.b16 %v72
    %v105 = vunpack.c.l.b16 %v73
    %v106 = vunpack.c.l.b16 %v74
    %v107 = vunpack.c.l.b16 %v75
    %v108 = vunpack.c.l.b16 %v76
    %v109 = vunpack.c.l.b16 %v77
    %v110 = vunpack.c.l.b16 %v78
    %v111 = vunpack.c.l.b16 %v79
    %v112 = vunpack.c.l.b16 %v80
    %v113 = vunpack.c.l.b16 %v81
    %v114 = vunpack.c.l.b16 %v82
    %v115 = vunpack.c.l.b16 %v83
    %v116 = vunpack.c.l.b16 %v84
    %v117 = vunpack.c.l.b16 %v85
    %v118 = vunpack.c.l.b16 %v86
    %v119 = vunpack.c.l.b16 %v87
    %v120 = vpack.c.b16 %v105, %v104
    %v121 = vpack.c.b16 %v107, %v106
    %v122 = vpack.c.b16 %v109, %v108
    %v123 = vpack.c.b16 %v111, %v110
    %v124 = vpack.c.b16 %v113, %v112
    %v125 = vpack.c.b16 %v115, %v114
    %v126 = vpack.c.b16 %v117, %v116
    %v127 = vpack.c.b16 %v119, %v118
    %136 = vmatprep.subr.bf16.mxu0 0
    %137 = vmatpush1.bf16.msra.mxu0 %v120
    %138 = vmatprep.subr.bf16.mxu0 0
    %139 = vmatpush1.bf16.msra.mxu0 %v121
    %140 = vmatprep.subr.bf16.mxu0 0
    %141 = vmatpush1.bf16.msra.mxu0 %v122
    %142 = vmatprep.subr.bf16.mxu0 0
    %143 = vmatpush1.bf16.msra.mxu0 %v123
    %144 = vmatprep.subr.bf16.mxu0 0
    %145 = vmatpush1.bf16.msra.mxu0 %v124
    %146 = vmatprep.subr.bf16.mxu0 0
    %147 = vmatpush1.bf16.msra.mxu0 %v125
    %148 = vmatprep.subr.bf16.mxu0 0
    %149 = vmatpush1.bf16.msra.mxu0 %v126
    %150 = vmatprep.subr.bf16.mxu0 0
    %151 = vmatpush1.bf16.msra.mxu0 %v127
    %152 = vmatprep.subr.bf16.mxu0 0
    %153 = vmatpush1.bf16.msra.mxu0 0
    %154 = vmatprep.subr.bf16.mxu0 0
    %155 = vmatpush1.bf16.msra.mxu0 0
    %156 = vmatprep.subr.bf16.mxu0 0
    %157 = vmatpush1.bf16.msra.mxu0 0
    %158 = vmatprep.subr.bf16.mxu0 0
    %159 = vmatpush1.bf16.msra.mxu0 0
    %160 = vmatprep.subr.bf16.mxu0 0
    %161 = vmatpush1.bf16.msra.mxu0 0
    %162 = vmatprep.subr.bf16.mxu0 0
    %163 = vmatpush1.bf16.msra.mxu0 0
    %164 = vmatprep.subr.bf16.mxu0 0
    %165 = vmatpush1.bf16.msra.mxu0 0
    %166 = vmatprep.subr.bf16.mxu0 0
    %167 = vmatpush1.bf16.msra.mxu0 0
    %168 = vmatprep.mubr.bf16.mxu0 0
    %169 = vmatmul.mubr.bf16.gmra.mrb[0].mxu0 %v68
    %v170 = vpop.f32.mrb[0].mxu0
    %v171 = vadd.f32 0.0, %v170
    %v172 = vpop.f32.mrb[0].mxu0
    %v173 = vpop.f32.mrb[0].mxu0
    %v174 = vadd.f32 0.0, %v173
    %v175 = vpop.f32.mrb[0].mxu0
    %176 = vmatprep.mubr.bf16.mxu0 0
    %177 = vmatmul.mubr.bf16.gmra.mrb[0].mxu0 %v69
    %v178 = vpop.f32.mrb[0].mxu0
    %v179 = vadd.f32 0.0, %v178
    %v180 = vpop.f32.mrb[0].mxu0
    %v181 = vpop.f32.mrb[0].mxu0
    %v182 = vadd.f32 0.0, %v181
    %v183 = vpop.f32.mrb[0].mxu0
    %184 = vmatprep.mubr.bf16.mxu0 0
    %185 = vmatmul.mubr.bf16.gmra.mrb[0].mxu0 %v70
    %v186 = vpop.f32.mrb[0].mxu0
    %v187 = vadd.f32 0.0, %v186
    %v188 = vpop.f32.mrb[0].mxu0
    %v189 = vpop.f32.mrb[0].mxu0
    %v190 = vadd.f32 0.0, %v189
    %v191 = vpop.f32.mrb[0].mxu0
    %192 = vmatprep.mubr.bf16.mxu0 0
    %193 = vmatmul.mubr.bf16.gmra.mrb[0].mxu0 %v71
    %v194 = vpop.f32.mrb[0].mxu0
    %v195 = vadd.f32 0.0, %v194
    %v196 = vpop.f32.mrb[0].mxu0
    %v197 = vpop.f32.mrb[0].mxu0
    %v198 = vadd.f32 0.0, %v197
    %v199 = vpop.f32.mrb[0].mxu0
    %200 = vdwg.mxu0
    %v201 = vpack.c.bf16 %v174, %v171
    %v202 = vpack.c.bf16 %v182, %v179
    %v203 = vpack.c.bf16 %v190, %v187
    %v204 = vpack.c.bf16 %v198, %v195
    %205 = vmatprep.subr.bf16.mxu0 0
    %206 = vmatpush1.bf16.xpose.msra.mxu0 %v201
    %207 = vmatprep.subr.bf16.mxu0 0
    %208 = vmatpush1.bf16.xpose.msra.mxu0 %v202
    %209 = vmatprep.subr.bf16.mxu0 0
    %210 = vmatpush1.bf16.xpose.msra.mxu0 %v203
    %211 = vmatprep.subr.bf16.mxu0 0
    %212 = vmatpush1.bf16.xpose.msra.mxu0 %v204
    %213 = vmatprep.subr.bf16.mxu0 0
    %214 = vmatpush1.bf16.xpose.msra.mxu0 0
    %215 = vmatprep.subr.bf16.mxu0 0
    %216 = vmatpush1.bf16.xpose.msra.mxu0 0
    %217 = vmatprep.subr.bf16.mxu0 0
    %218 = vmatpush1.bf16.xpose.msra.mxu0 0
    %219 = vmatprep.subr.bf16.mxu0 0
    %220 = vmatpush1.bf16.xpose.msra.mxu0 0
    %221 = vmatprep.subr.bf16.mxu0 0
    %222 = vmatpush1.bf16.xpose.msra.mxu0 0
    %223 = vmatprep.subr.bf16.mxu0 0
    %224 = vmatpush1.bf16.xpose.msra.mxu0 0
    %225 = vmatprep.subr.bf16.mxu0 0
    %226 = vmatpush1.bf16.xpose.msra.mxu0 0
    %227 = vmatprep.subr.bf16.mxu0 0
    %228 = vmatpush1.bf16.xpose.msra.mxu0 0
    %229 = vmatprep.subr.bf16.mxu0 0
    %230 = vmatpush1.bf16.xpose.msra.mxu0 0
    %231 = vmatprep.subr.bf16.mxu0 0
    %232 = vmatpush1.bf16.xpose.msra.mxu0 0
    %233 = vmatprep.subr.bf16.mxu0 0
    %234 = vmatpush1.bf16.xpose.msra.mxu0 0
    %235 = vmatprep.subr.bf16.mxu0 0
    %236 = vmatpush1.bf16.xpose.msra.mxu0 0
    %237 = vmatprep.mubr.bf16.mxu0 0
    %238 = vmatmul.mubr.bf16.gmra.mrb[0].mxu0 %v201
    %v239 = vpop.f32.mrb[0].mxu0
    %v240 = vadd.f32 0.0, %v239
    %v241 = vpop.f32.mrb[0].mxu0
    %v242 = vpop.f32.mrb[0].mxu0
    %v243 = vadd.f32 0.0, %v242
    %v244 = vpop.f32.mrb[0].mxu0
    %245 = vmatprep.mubr.bf16.mxu0 0
    %246 = vmatmul.mubr.bf16.gmra.mrb[0].mxu0 %v202
    %v247 = vpop.f32.mrb[0].mxu0
    %v248 = vadd.f32 0.0, %v247
    %v249 = vpop.f32.mrb[0].mxu0
    %v250 = vpop.f32.mrb[0].mxu0
    %v251 = vadd.f32 0.0, %v250
    %v252 = vpop.f32.mrb[0].mxu0
    %253 = vmatprep.mubr.bf16.mxu0 0
    %254 = vmatmul.mubr.bf16.gmra.mrb[0].mxu0 %v203
    %v255 = vpop.f32.mrb[0].mxu0
    %v256 = vadd.f32 0.0, %v255
    %v257 = vpop.f32.mrb[0].mxu0
    %v258 = vpop.f32.mrb[0].mxu0
    %v259 = vadd.f32 0.0, %v258
    %v260 = vpop.f32.mrb[0].mxu0
    %261 = vmatprep.mubr.bf16.mxu0 0
    %262 = vmatmul.mubr.bf16.gmra.mrb[0].mxu0 %v204
    %v263 = vpop.f32.mrb[0].mxu0
    %v264 = vadd.f32 0.0, %v263
    %v265 = vpop.f32.mrb[0].mxu0
    %v266 = vpop.f32.mrb[0].mxu0
    %v267 = vadd.f32 0.0, %v266
    %v268 = vpop.f32.mrb[0].mxu0
    %269 = vdwg.mxu0
    %v270 = vmax.f32 %v240, 0.0
    %v271 = vmax.f32 %v243, 0.0
    %v272 = vmax.f32 %v248, 0.0
    %v273 = vmax.f32 %v251, 0.0
    %v274 = vmax.f32 %v256, 0.0
    %v275 = vmax.f32 %v259, 0.0
    %v276 = vmax.f32 %v264, 0.0
    %v277 = vmax.f32 %v267, 0.0
    %v278 = vld [vmem:[#allocation7] sm:$0xff]
    %v279 = vld [vmem:[#allocation7 + $0x8] sm:$0xff]
    %v280 = vld [vmem:[#allocation7 + $0x10] sm:$0xff]
    %v281 = vld [vmem:[#allocation7 + $0x18] sm:$0xff]
    %v282 = vld [vmem:[#allocation7 + $0x20] sm:$0xff]
    %v283 = vld [vmem:[#allocation7 + $0x28] sm:$0xff]
    %v284 = vld [vmem:[#allocation7 + $0x30] sm:$0xff]
    %v285 = vld [vmem:[#allocation7 + $0x38] sm:$0xff]
    %v286 = vmul.f32 %v270, %v278
    %v287 = vmul.f32 %v271, %v279
    %v288 = vmul.f32 %v272, %v280
    %v289 = vmul.f32 %v273, %v281
    %v290 = vmul.f32 %v274, %v282
    %v291 = vmul.f32 %v275, %v283
    %v292 = vmul.f32 %v276, %v284
    %v293 = vmul.f32 %v277, %v285
    %vm294 = vcmask 523264
    %v295 = vsel %vm294, %v286, 0.0
    %296 = vadd.xlane.f32.xlu0 %v295
    %v297 = vpop.xlane.xlu0 %296
    %v298 = vsel %vm294, %v287, 0.0
    %299 = vadd.xlane.f32.xlu0 %v298
    %v300 = vpop.xlane.xlu0 %299
    %v301 = vsel %vm294, %v288, 0.0
    %302 = vadd.xlane.f32.xlu0 %v301
    %v303 = vpop.xlane.xlu0 %302
    %v304 = vsel %vm294, %v289, 0.0
    %305 = vadd.xlane.f32.xlu0 %v304
    %v306 = vpop.xlane.xlu0 %305
    %v307 = vsel %vm294, %v290, 0.0
    %308 = vadd.xlane.f32.xlu0 %v307
    %v309 = vpop.xlane.xlu0 %308
    %v310 = vsel %vm294, %v291, 0.0
    %311 = vadd.xlane.f32.xlu0 %v310
    %v312 = vpop.xlane.xlu0 %311
    %v313 = vsel %vm294, %v292, 0.0
    %314 = vadd.xlane.f32.xlu0 %v313
    %v315 = vpop.xlane.xlu0 %314
    %v316 = vsel %vm294, %v293, 0.0
    %317 = vadd.xlane.f32.xlu0 %v316
    %v318 = vpop.xlane.xlu0 %317
    %v319 = vrot.slane %v297, 4
    %v320 = vadd.f32 %v297, %v319
    %v321 = vrot.slane %v320, 2
    %v322 = vadd.f32 %v320, %v321
    %v323 = vrot.slane %v322, 1
    %v324 = vadd.f32 %v322, %v323
    %v325 = vrot.slane %v300, 4
    %v326 = vadd.f32 %v300, %v325
    %v327 = vrot.slane %v326, 2
    %v328 = vadd.f32 %v326, %v327
    %v329 = vrot.slane %v328, 1
    %v330 = vadd.f32 %v328, %v329
    %v331 = vrot.slane %v303, 4
    %v332 = vadd.f32 %v303, %v331
    %v333 = vrot.slane %v332, 2
    %v334 = vadd.f32 %v332, %v333
    %v335 = vrot.slane %v334, 1
    %v336 = vadd.f32 %v334, %v335
    %v337 = vrot.slane %v306, 4
    %v338 = vadd.f32 %v306, %v337
    %v339 = vrot.slane %v338, 2
    %v340 = vadd.f32 %v338, %v339
    %v341 = vrot.slane %v340, 1
    %v342 = vadd.f32 %v340, %v341
    %v343 = vrot.slane %v309, 4
    %v344 = vadd.f32 %v309, %v343
    %v345 = vrot.slane %v344, 2
    %v346 = vadd.f32 %v344, %v345
    %v347 = vrot.slane %v346, 1
    %v348 = vadd.f32 %v346, %v347
    %v349 = vrot.slane %v312, 4
    %v350 = vadd.f32 %v312, %v349
    %v351 = vrot.slane %v350, 2
    %v352 = vadd.f32 %v350, %v351
    %v353 = vrot.slane %v352, 1
    %v354 = vadd.f32 %v352, %v353
    %v355 = vrot.slane %v315, 4
    %v356 = vadd.f32 %v315, %v355
    %v357 = vrot.slane %v356, 2
    %v358 = vadd.f32 %v356, %v357
    %v359 = vrot.slane %v358, 1
    %v360 = vadd.f32 %v358, %v359
    %v361 = vrot.slane %v318, 4
    %v362 = vadd.f32 %v318, %v361
    %v363 = vrot.slane %v362, 2
    %v364 = vadd.f32 %v362, %v363
    %v365 = vrot.slane %v364, 1
    %v366 = vadd.f32 %v364, %v365
    %v367 = vrcp.pop %v324
    %v368 = vmul.f32 %v297, %v367
    %v369 = vrcp.pop %v330
    %v370 = vmul.f32 %v300, %v369
    %v371 = vrcp.pop %v336
    %v372 = vmul.f32 %v303, %v371
    %v373 = vrcp.pop %v342
    %v374 = vmul.f32 %v306, %v373
    %v375 = vrcp.pop %v348
    %v376 = vmul.f32 %v309, %v375
    %v377 = vrcp.pop %v354
    %v378 = vmul.f32 %v312, %v377
    %v379 = vrcp.pop %v360
    %v380 = vmul.f32 %v315, %v379
    %v381 = vrcp.pop %v366
    %v382 = vmul.f32 %v318, %v381
    %v383 = vmul.f32 %v171, %v368
    %v384 = vmul.f32 %v174, %v370
    %v385 = vmul.f32 %v179, %v372
    %v386 = vmul.f32 %v182, %v374
    %v387 = vmul.f32 %v187, %v376
    %v388 = vmul.f32 %v190, %v378
    %v389 = vmul.f32 %v195, %v380
    %v390 = vmul.f32 %v198, %v382
    %v391 = vrot.slane %v383, 4
    %v392 = vadd.f32 %v383, %v391
    %v393 = vrot.slane %v392, 2
    %v394 = vadd.f32 %v392, %v393
    %v395 = vrot.slane %v394, 1
    %v396 = vadd.f32 %v394, %v395
    %v397 = vrot.slane %v384, 4
    %v398 = vadd.f32 %v384, %v397
    %v399 = vrot.slane %v398, 2
    %v400 = vadd.f32 %v398, %v399
    %v401 = vrot.slane %v400, 1
    %v402 = vadd.f32 %v400, %v401
    %v403 = vrot.slane %v385, 4
    %v404 = vadd.f32 %v385, %v403
    %v405 = vrot.slane %v404, 2
    %v406 = vadd.f32 %v404, %v405
    %v407 = vrot.slane %v406, 1
    %v408 = vadd.f32 %v406, %v407
    %v409 = vrot.slane %v386, 4
    %v410 = vadd.f32 %v386, %v409
    %v411 = vrot.slane %v410, 2
    %v412 = vadd.f32 %v410, %v411
    %v413 = vrot.slane %v412, 1
    %v414 = vadd.f32 %v412, %v413
    %v415 = vrot.slane %v387, 4
    %v416 = vadd.f32 %v387, %v415
    %v417 = vrot.slane %v416, 2
    %v418 = vadd.f32 %v416, %v417
    %v419 = vrot.slane %v418, 1
    %v420 = vadd.f32 %v418, %v419
    %v421 = vrot.slane %v388, 4
    %v422 = vadd.f32 %v388, %v421
    %v423 = vrot.slane %v422, 2
    %v424 = vadd.f32 %v422, %v423
    %v425 = vrot.slane %v424, 1
    %v426 = vadd.f32 %v424, %v425
    %v427 = vrot.slane %v389, 4
    %v428 = vadd.f32 %v389, %v427
    %v429 = vrot.slane %v428, 2
    %v430 = vadd.f32 %v428, %v429
    %v431 = vrot.slane %v430, 1
    %v432 = vadd.f32 %v430, %v431
    %v433 = vrot.slane %v390, 4
    %v434 = vadd.f32 %v390, %v433
    %v435 = vrot.slane %v434, 2
    %v436 = vadd.f32 %v434, %v435
    %v437 = vrot.slane %v436, 1
    %v438 = vadd.f32 %v436, %v437
    %vm447 = vcmask 1041409
    %v448 = vsel %vm447, %v402, %v396
    %vm449 = vcmask 1042434
    %v450 = vsel %vm449, %v408, %v448
    %vm451 = vcmask 1043459
    %v452 = vsel %vm451, %v414, %v450
    %vm453 = vcmask 1044484
    %v454 = vsel %vm453, %v420, %v452
    %vm455 = vcmask 1045509
    %v456 = vsel %vm455, %v426, %v454
    %vm457 = vcmask 1046534
    %v458 = vsel %vm457, %v432, %v456
    %vm459 = vcmask 1047559
    %v460 = vsel %vm459, %v438, %v458
    %462 = vst [vmem:[#allocation8] sm:$0xff] %v460
    %v471 = vlaneseq
    %v472 = vand.u32 %v471, 127
    %v473 = vlaneseq
    %v474 = vshrl.u32 %v473, 7
    %v475 = vsub.s32 %v472, %v474
    %v476 = vrot.slane %v368, %v475
    %v477 = vlaneseq
    %v478 = vshrl.u32 %v477, 7
    %v479 = vsub.s32 %v472, %v478
    %v480 = vrot.slane %v370, %v479
    %v481 = vlaneseq
    %v482 = vshrl.u32 %v481, 7
    %v483 = vsub.s32 %v472, %v482
    %v484 = vrot.slane %v372, %v483
    %v485 = vlaneseq
    %v486 = vshrl.u32 %v485, 7
    %v487 = vsub.s32 %v472, %v486
    %v488 = vrot.slane %v374, %v487
    %v489 = vlaneseq
    %v490 = vshrl.u32 %v489, 7
    %v491 = vsub.s32 %v472, %v490
    %v492 = vrot.slane %v376, %v491
    %v493 = vlaneseq
    %v494 = vshrl.u32 %v493, 7
    %v495 = vsub.s32 %v472, %v494
    %v496 = vrot.slane %v378, %v495
    %v497 = vlaneseq
    %v498 = vshrl.u32 %v497, 7
    %v499 = vsub.s32 %v472, %v498
    %v500 = vrot.slane %v380, %v499
    %v501 = vlaneseq
    %v502 = vshrl.u32 %v501, 7
    %v503 = vsub.s32 %v472, %v502
    %v504 = vrot.slane %v382, %v503
    %v505 = vsel %vm447, %v480, %v476
    %v506 = vsel %vm449, %v484, %v505
    %v507 = vsel %vm451, %v488, %v506
    %v508 = vsel %vm453, %v492, %v507
    %v509 = vsel %vm455, %v496, %v508
    %v510 = vsel %vm457, %v500, %v509
    %v511 = vsel %vm459, %v504, %v510
    %vm513 = vcmask 64512
    %v514 = vsel %vm513, %v511, 0.0
    %515 = vst [vmem:[#allocation9] sm:$0xff] %v514
    // Predicated region
    $region26: #{tpu_custom_call.1} parent=1 // pred_check
      _
    $region27: #{tpu_custom_call.1} parent=1 // pred_check_branch
      %517 = sbr.rel (0) target = $region29
    $region28: #{tpu_custom_call.1} parent=1 // pred_region
      %s519 = ssub.s32 128, 128
      %520 = vsyncadd [#allocation4], %s519
      %s522 = sshll.u32 [#allocation8], 4
      %s523 = int_to_ptr.vmem [resolvable:$true] %s522
      %525 = dma.vmem_to_hbm [thread:$0]  %s523, 128, %s3, [#allocation4]
    $region29: #{tpu_custom_call.1} parent=1 // pred_fallthru
      _
    // Predicated region
    $region30: #{tpu_custom_call.1} parent=1 // pred_check
      _
    $region31: #{tpu_custom_call.1} parent=1 // pred_check_branch
      %527 = sbr.rel (0) target = $region33
    $region32: #{tpu_custom_call.1} parent=1 // pred_region
      %s529 = ssub.s32 128, 128
      %530 = vsyncadd [#allocation10], %s529
      %s532 = sshll.u32 [#allocation9], 4
      %s533 = int_to_ptr.vmem [resolvable:$true] %s532
      %535 = dma.vmem_to_hbm [thread:$0]  %s533, 128, %s4, [#allocation10]
    $region33: #{tpu_custom_call.1} parent=1 // pred_fallthru
      _
    // Predicated region
    $region34: #{tpu_custom_call.1} parent=1 // pred_check
      _
    $region35: #{tpu_custom_call.1} parent=1 // pred_check_branch
      %537 = sbr.rel (0) target = $region37
    $region36: #{tpu_custom_call.1} parent=1 // pred_region
      %538 = dma.done [#allocation4], 128
    $region37: #{tpu_custom_call.1} parent=1 // pred_fallthru
      _
    // Predicated region
    $region38: #{tpu_custom_call.1} parent=1 // pred_check
      _
    $region39: #{tpu_custom_call.1} parent=1 // pred_check_branch
      %540 = sbr.rel (0) target = $region41
    $region40: #{tpu_custom_call.1} parent=1 // pred_region
      %541 = dma.done [#allocation10], 128
    $region41: #{tpu_custom_call.1} parent=1 // pred_fallthru
      _
    %542 = vsyncpa [#allocation3], 1
    %543 = vsyncpa [#allocation6], 1
    %544 = vsyncpa [#allocation4], 1
    %545 = vsyncpa [#allocation10], 1

</llo_original>
